<compile_context>
chip_gen: v5e
topology: v5e:2x2
jax: 0.10.0
libtpu: 0.0.40
codegen_flags: <defaults>
</compile_context>

<pallas_src>
import functools
import math

import numpy as np
import jax
import jax.numpy as jnp
from jax.experimental import pallas as pl
from jax.experimental.pallas import tpu as pltpu


# ----------------------------------------------------------------------------
# Helpers
# ----------------------------------------------------------------------------

VMEM_LIMIT_BYTES = 48 * 1024 * 1024   # fits v5e/v6e (128 MiB) and v7x (64 MiB) parts


def _round_up(x, m):
    return ((x + m - 1) // m) * m


def _largest_divisor_leq(n, cap):
    cap = min(n, cap)
    for d in range(cap, 0, -1):
        if n % d == 0:
            return d
    return 1


def _cparams(n_axes):
    return pltpu.CompilerParams(
        dimension_semantics=("parallel",) * n_axes,
        vmem_limit_bytes=VMEM_LIMIT_BYTES,
    )


# ----------------------------------------------------------------------------
# Pallas kernels
# ----------------------------------------------------------------------------

def _mm_kernel(a_ref, b_ref, bias_ref, o_ref, *, relu):
    acc = jnp.dot(a_ref[...], b_ref[...], preferred_element_type=jnp.float32)
    acc = acc + bias_ref[...]
    if relu:
        acc = jnp.maximum(acc, 0.0)
    o_ref[...] = acc


def _mm_res_kernel(a_ref, b_ref, bias_ref, res_ref, o_ref, *, relu):
    acc = jnp.dot(a_ref[...], b_ref[...], preferred_element_type=jnp.float32)
    acc = acc + bias_ref[...]
    if relu:
        acc = jnp.maximum(acc, 0.0)
    o_ref[...] = acc + res_ref[...]


def matmul_bias(a, b, bias=None, relu=False, res=None):
    """(M,K) @ (K,N) + bias [+ res], optional ReLU.

    M is tiled over a 1-D parallel grid; K and N stay whole (<=384 here).
    Inputs are cast to bf16 for the MXU, accumulation stays f32."""
    M, K = a.shape
    N = b.shape[1]
    a_bf = a.astype(jnp.bfloat16)
    b_bf = b.astype(jnp.bfloat16)
    if bias is None:
        bias = jnp.zeros((N,), jnp.float32)
    bias2 = bias.reshape(1, N).astype(jnp.float32)

    m8 = _round_up(M, 8)
    tm = m8 if m8 <= 1024 else 512
    M_pad = _round_up(M, tm)
    if M_pad != M:
        a_bf = jnp.pad(a_bf, ((0, M_pad - M), (0, 0)))
        if res is not None:
            res = jnp.pad(res, ((0, M_pad - M), (0, 0)))
    grid = (M_pad // tm,)

    in_specs = [
        pl.BlockSpec((tm, K), lambda i: (i, 0)),
        pl.BlockSpec((K, N), lambda i: (0, 0)),
        pl.BlockSpec((1, N), lambda i: (0, 0)),
    ]
    args = [a_bf, b_bf, bias2]
    if res is not None:
        kernel = functools.partial(_mm_res_kernel, relu=relu)
        in_specs.append(pl.BlockSpec((tm, N), lambda i: (i, 0)))
        args.append(res.astype(jnp.float32))
    else:
        kernel = functools.partial(_mm_kernel, relu=relu)

    out = pl.pallas_call(
        kernel,
        grid=grid,
        in_specs=in_specs,
        out_specs=pl.BlockSpec((tm, N), lambda i: (i, 0)),
        out_shape=jax.ShapeDtypeStruct((M_pad, N), jnp.float32),
        compiler_params=_cparams(1),
    )(*args)
    return out[:M] if M_pad != M else out


def conv3x3_reflect(x, w, b):
    """3x3 stride-1 conv, reflect padding, done as 9 in-kernel tap matmuls
    (no 9x im2col HBM blow-up).  x: (B,H,W,Cin) NHWC, w: (3,3,Cin,Cout)."""
    B, H, W, Cin = x.shape
    Cout = w.shape[-1]
    xp = jnp.pad(x, ((0, 0), (1, 1), (1, 1), (0, 0)), mode="reflect").astype(jnp.bfloat16)
    w_bf = w.astype(jnp.bfloat16)
    bias2 = b.reshape(1, Cout).astype(jnp.float32)

    def kernel(x_ref, w_ref, b_ref, o_ref):
        xv = x_ref[0]                                    # (H+2, W+2, Cin)
        wv = w_ref[...]                                  # (3, 3, Cin, Cout)
        acc = jnp.zeros((H, W, Cout), jnp.float32)
        for dh in range(3):
            for dw in range(3):
                patch = xv[dh:dh + H, dw:dw + W, :]      # (H, W, Cin)
                wtap = jnp.broadcast_to(wv[dh, dw][None], (H, Cin, Cout))
                acc = acc + jnp.einsum("hwc,hco->hwo", patch, wtap,
                                       preferred_element_type=jnp.float32)
        o_ref[0] = acc + b_ref[...]

    return pl.pallas_call(
        kernel,
        grid=(B,),
        in_specs=[
            pl.BlockSpec((1, H + 2, W + 2, Cin), lambda i: (i, 0, 0, 0)),
            pl.BlockSpec((3, 3, Cin, Cout), lambda i: (0, 0, 0, 0)),
            pl.BlockSpec((1, Cout), lambda i: (0, 0)),
        ],
        out_specs=pl.BlockSpec((1, H, W, Cout), lambda i: (i, 0, 0, 0)),
        out_shape=jax.ShapeDtypeStruct((B, H, W, Cout), jnp.float32),
        compiler_params=_cparams(1),
    )(xp, w_bf, bias2)


def dwconv5_reflect(x, w, b, add=None):
    """Depthwise 5x5 conv, reflect padding 2, optional fused elementwise add.
    x: (B,H,W,C) NHWC, w: (5,5,C), b: (C,), add: (B,H,W,C) or None."""
    B, H, W, C = x.shape
    xp = jnp.pad(x, ((0, 0), (2, 2), (2, 2), (0, 0)), mode="reflect")
    has_add = add is not None

    def kernel(*refs):
        if has_add:
            x_ref, w_ref, b_ref, a_ref, o_ref = refs
        else:
            x_ref, w_ref, b_ref, o_ref = refs
        xv = x_ref[0]            # (H+4, W+4, C)
        wv = w_ref[...]          # (5, 5, C)
        acc = jnp.zeros((H, W, C), jnp.float32)
        for dh in range(5):
            for dw in range(5):
                acc = acc + xv[dh:dh + H, dw:dw + W, :] * wv[dh, dw]
        acc = acc + b_ref[...]
        if has_add:
            acc = acc + a_ref[0]
        o_ref[0] = acc

    in_specs = [
        pl.BlockSpec((1, H + 4, W + 4, C), lambda i: (i, 0, 0, 0)),
        pl.BlockSpec((5, 5, C), lambda i: (0, 0, 0)),
        pl.BlockSpec((1, C), lambda i: (0, 0)),
    ]
    args = [xp, w, b.reshape(1, C)]
    if has_add:
        in_specs.append(pl.BlockSpec((1, H, W, C), lambda i: (i, 0, 0, 0)))
        args.append(add)

    # TODO(synk): for very large H, tile H into the grid and pack (W,C) lane-dense.
    return pl.pallas_call(
        kernel,
        grid=(B,),
        in_specs=in_specs,
        out_specs=pl.BlockSpec((1, H, W, C), lambda i: (i, 0, 0, 0)),
        out_shape=jax.ShapeDtypeStruct((B, H, W, C), jnp.float32),
        compiler_params=_cparams(1),
    )(*args)


def groupnorm(x, weight, bias, groups=4, eps=1e-5):
    """GroupNorm(groups, C) over NHWC input; group stats computed with masked
    VPU reductions (no MXU dots)."""
    B, H, W, C = x.shape
    cg = C // groups
    denom = float(cg * H * W)

    def kernel(x_ref, w_ref, b_ref, o_ref):
        xv = x_ref[0]                                    # (H, W, C)
        x2 = xv * xv
        ch = jax.lax.broadcasted_iota(jnp.int32, (1, 1, C), 2)
        mean_c = jnp.zeros((1, 1, C), jnp.float32)
        var_c = jnp.zeros((1, 1, C), jnp.float32)
        for g in range(groups):
            gmask = (ch >= g * cg) & (ch < (g + 1) * cg)
            m1 = jnp.sum(jnp.where(gmask, xv, 0.0)) / denom
            m2 = jnp.sum(jnp.where(gmask, x2, 0.0)) / denom
            mean_c = jnp.where(gmask, m1, mean_c)
            var_c = jnp.where(gmask, m2 - m1 * m1, var_c)
        inv = jax.lax.rsqrt(var_c + eps)
        o_ref[0] = (xv - mean_c) * inv * w_ref[...] + b_ref[...]

    return pl.pallas_call(
        kernel,
        grid=(B,),
        in_specs=[
            pl.BlockSpec((1, H, W, C), lambda i: (i, 0, 0, 0)),
            pl.BlockSpec((1, C), lambda i: (0, 0)),
            pl.BlockSpec((1, C), lambda i: (0, 0)),
        ],
        out_specs=pl.BlockSpec((1, H, W, C), lambda i: (i, 0, 0, 0)),
        out_shape=jax.ShapeDtypeStruct((B, H, W, C), jnp.float32),
        compiler_params=_cparams(1),
    )(x, weight.reshape(1, C), bias.reshape(1, C))


def _wattn_kernel(q_ref, k_ref, v_ref, bias_ref, mask_ref, o_ref, *, scale):
    wb, nH, N, hd = q_ref.shape
    qv = q_ref[...].reshape(wb * nH, N, hd)
    kv = k_ref[...].reshape(wb * nH, N, hd)
    vv = v_ref[...].reshape(wb * nH, N, hd)
    s = jnp.einsum("bnd,bmd->bnm", qv, kv,
                   preferred_element_type=jnp.float32) * scale
    s = s.reshape(wb, nH, N, N)
    s = s + bias_ref[...][None] + mask_ref[...][:, None]
    s = s - jnp.max(s, axis=-1, keepdims=True)
    p = jnp.exp(s)
    p = p * pl.reciprocal(jnp.sum(p, axis=-1, keepdims=True), approx=True)
    p = p.reshape(wb * nH, N, N).astype(vv.dtype)
    out = jnp.einsum("bnm,bmd->bnd", p, vv, preferred_element_type=jnp.float32)
    o_ref[...] = out.reshape(wb, nH, N, hd)


def window_attention_pallas(q, k, v, bias, mask, scale, wb, period_blocks):
    """Batched-window multi-head attention.
    q,k,v: (Bw, nH, N, hd) bf16; bias: (nH, N, N); mask: (P, N, N) with P = wb*period_blocks.
    wb windows are processed per grid step; the shift mask is indexed modulo its period
    instead of being tiled in HBM."""
    Bw, nH, N, hd = q.shape
    grid = (Bw // wb,)
    if period_blocks == 1:
        mask_map = lambda g: (0, 0, 0)
    else:
        mask_map = lambda g, pb=period_blocks: (g % pb, 0, 0)

    return pl.pallas_call(
        functools.partial(_wattn_kernel, scale=scale),
        grid=grid,
        in_specs=[
            pl.BlockSpec((wb, nH, N, hd), lambda g: (g, 0, 0, 0)),
            pl.BlockSpec((wb, nH, N, hd), lambda g: (g, 0, 0, 0)),
            pl.BlockSpec((wb, nH, N, hd), lambda g: (g, 0, 0, 0)),
            pl.BlockSpec((nH, N, N), lambda g: (0, 0, 0)),
            pl.BlockSpec((wb, N, N), mask_map),
        ],
        out_specs=pl.BlockSpec((wb, nH, N, hd), lambda g: (g, 0, 0, 0)),
        out_shape=jax.ShapeDtypeStruct((Bw, nH, N, hd), jnp.float32),
        compiler_params=_cparams(1),
    )(q, k, v, bias, mask)


# ----------------------------------------------------------------------------
# JAX glue built on the Pallas kernels
# ----------------------------------------------------------------------------

def conv1x1(x, w, b=None, relu=False, res=None):
    B, H, W, C = x.shape
    Cout = w.shape[1]
    res2 = res.reshape(B * H * W, Cout) if res is not None else None
    y = matmul_bias(x.reshape(B * H * W, C), w, b, relu=relu, res=res2)
    return y.reshape(B, H, W, Cout)


def conv2x2_s2(x, w, b):
    """2x2 stride-2 conv (patch-merge).  w: (2,2,Cin,Cout)."""
    B, H, W, C = x.shape
    xr = x.reshape(B, H // 2, 2, W // 2, 2, C).transpose(0, 1, 3, 2, 4, 5)
    xr = xr.reshape(B * (H // 2) * (W // 2), 4 * C)
    Cout = w.shape[-1]
    y = matmul_bias(xr, w.reshape(4 * C, Cout), b)
    return y.reshape(B, H // 2, W // 2, Cout)


def pixel_shuffle(x, r):
    if r == 1:
        return x
    B, H, W, Cr2 = x.shape
    C = Cr2 // (r * r)
    x = x.reshape(B, H, W, C, r, r).transpose(0, 1, 4, 2, 5, 3)
    return x.reshape(B, H * r, W * r, C)


def window_partition(x, ws):
    B, H, W, C = x.shape
    x = x.reshape(B, H // ws, ws, W // ws, ws, C).transpose(0, 1, 3, 2, 4, 5)
    return x.reshape(-1, ws * ws, C)


def window_reverse(wins, ws, H, W):
    B = wins.shape[0] // ((H // ws) * (W // ws))
    x = wins.reshape(B, H // ws, W // ws, ws, ws, -1).transpose(0, 1, 3, 2, 4, 5)
    return x.reshape(B, H, W, -1)


# ----------------------------------------------------------------------------
# Constant tables (relative positions, shifted-window masks)
# ----------------------------------------------------------------------------

def get_relative_positions(ws):
    coords = np.stack(np.meshgrid(np.arange(ws), np.arange(ws), indexing="ij"))
    flat = coords.reshape(2, -1)
    rel = (flat[:, :, None] - flat[:, None, :]).transpose(1, 2, 0).astype(np.float32)
    return np.sign(rel) * np.log(1.0 + np.abs(rel))            # (N,N,2)


def build_attn_masks(res, ws, shift):
    H = W = res
    img_mask = np.zeros((1, H, W, 1), np.float32)
    h_slices = (slice(0, -ws), slice(-ws, -shift), slice(-shift, None))
    w_slices = (slice(0, -ws), slice(-ws, -shift), slice(-shift, None))
    cnt = 0
    for h in h_slices:
        for w in w_slices:
            img_mask[:, h, w, :] = cnt
            cnt += 1
    mw = img_mask.reshape(1, H // ws, ws, W // ws, ws, 1).transpose(0, 1, 3, 2, 4, 5)
    mw = mw.reshape(-1, ws * ws)
    attn_mask = mw[:, None, :] - mw[:, :, None]
    attn_mask = np.where(attn_mask != 0, -100.0, 0.0).astype(np.float32)
    mask_sum = attn_mask.sum(axis=(1, 2)).astype(np.int32)
    mask_uq = np.unique(mask_sum)
    if len(mask_uq) > 1:
        index_2 = np.where(mask_sum == mask_uq[1])
        # NOTE: the PyTorch code aliases cloud_mask = attn_mask, so BOTH masks are modified.
        attn_mask[index_2] = -100.0
    return attn_mask


# ----------------------------------------------------------------------------
# Parameter construction (deterministic synthetic init)
# ----------------------------------------------------------------------------

class KeyGen:
    def __init__(self, seed=0):
        self.key = jax.random.PRNGKey(seed)

    def __call__(self):
        self.key, sub = jax.random.split(self.key)
        return sub


def _normal(kg, shape, std=0.02):
    return std * jax.random.normal(kg(), shape, dtype=jnp.float32)


def lin_params(kg, cin, cout, bias=True):
    return {"w": _normal(kg, (cin, cout)),
            "b": jnp.zeros((cout,), jnp.float32) if bias else None}


def conv_params(kg, k, cin, cout):
    return {"w": _normal(kg, (k, k, cin, cout)), "b": jnp.zeros((cout,), jnp.float32)}


def skfusion_params(kg, dim):
    d = max(int(dim / 8), 4)
    return {"w1": _normal(kg, (dim, d)), "w2": _normal(kg, (d, 2 * dim))}


def build_attention_params(kg, dim, num_heads, ws_eff, shift_eff, use_attn, res):
    p = {"V": lin_params(kg, dim, dim),
         "proj": lin_params(kg, dim, dim),
         "conv": {"w": _normal(kg, (5, 5, dim)), "b": jnp.zeros((dim,), jnp.float32)}}
    if use_attn:
        p["QK"] = lin_params(kg, dim, 2 * dim)
        p["cloud_conv"] = lin_params(kg, 2 * dim, dim)
        # relative position bias: meta MLP(2 -> 256 -> nH) on log-relative coords
        mw1, mb1 = _normal(kg, (2, 256)), jnp.zeros((256,), jnp.float32)
        mw2, mb2 = _normal(kg, (256, num_heads)), jnp.zeros((num_heads,), jnp.float32)
        rel = jnp.asarray(get_relative_positions(ws_eff))       # (N,N,2)
        N = ws_eff * ws_eff
        h1 = matmul_bias(rel.reshape(N * N, 2), mw1, mb1, relu=True)
        rb = matmul_bias(h1, mw2, mb2).reshape(N, N, num_heads)
        p["rel_bias"] = jnp.transpose(rb, (2, 0, 1))            # (nH,N,N)
        if shift_eff > 0:
            m = jnp.asarray(build_attn_masks(res, ws_eff, shift_eff))
            p["attn_mask"] = m
            p["cloud_mask"] = m                                 # aliased, as in PyTorch
        else:
            p["attn_mask"] = None
            p["cloud_mask"] = None
    return p


def build_basic_layer(kg, dim, res, depth, num_heads, mlp_ratio, window_size, attn_ratio):
    attn_depth = attn_ratio * depth
    use_attns = [i >= depth - attn_depth for i in range(depth)]
    params, cfgs = [], []
    for i in range(depth):
        shift = 0 if i % 2 == 0 else window_size // 2
        ws_eff, shift_eff = window_size, shift
        if res <= window_size:
            shift_eff, ws_eff = 0, int(res)
        use_attn = bool(use_attns[i])
        hidden = int(dim * mlp_ratio)
        cfg = dict(dim=dim, num_heads=num_heads, window_size=ws_eff,
                   shift_size=shift_eff, use_attn=use_attn)
        p = {}
        if use_attn:
            p["norm1"] = {"w": jnp.ones((dim,), jnp.float32), "b": jnp.zeros((dim,), jnp.float32)}
        p["attn"] = build_attention_params(kg, dim, num_heads, ws_eff, shift_eff, use_attn, int(res))
        p["mlp"] = {"fc1": lin_params(kg, dim, hidden), "fc2": lin_params(kg, hidden, dim)}
        params.append(p)
        cfgs.append(cfg)
    return params, cfgs


# ----------------------------------------------------------------------------
# Forward-pass modules
# ----------------------------------------------------------------------------

def attention_forward(p, cfg, x, residual):                      # x NHWC
    C = cfg["dim"]
    ws, shift = cfg["window_size"], cfg["shift_size"]
    B, H, W, _ = x.shape
    shifted = jnp.roll(x, shift=(-shift, -shift), axis=(1, 2)) if shift > 0 else x

    V = conv1x1(shifted, p["V"]["w"], p["V"]["b"])
    if cfg["use_attn"]:
        QK = conv1x1(shifted, p["QK"]["w"], p["QK"]["b"])
        QKV = jnp.concatenate([QK, V], axis=-1)                  # (B,H,W,3C)
        qkv = window_partition(QKV, ws)                          # (Bw,N,3C)
        Bw, N, _ = qkv.shape
        nH = cfg["num_heads"]
        hd = C // nH
        qkv_r = qkv.reshape(Bw, N, 3, nH, hd).transpose(2, 0, 3, 1, 4)
        q = qkv_r[0].astype(jnp.bfloat16)                        # (Bw,nH,N,hd)
        k = qkv_r[1].astype(jnp.bfloat16)
        v = qkv_r[2].astype(jnp.bfloat16)
        scale = hd ** (-0.5)
        bias = p["rel_bias"]

        if p["attn_mask"] is not None:
            nWm = p["attn_mask"].shape[0]
            wb = _largest_divisor_leq(math.gcd(Bw, nWm), 32)
            mask_arr, period_blocks = p["attn_mask"], nWm // wb
        else:
            wb = _largest_divisor_leq(Bw, 32)
            mask_arr, period_blocks = jnp.zeros((wb, N, N), jnp.float32), 1

        # NOTE: the PyTorch module runs the window attention twice (attn_mask and
        # cloud_mask), but cloud_mask aliases attn_mask so both results are identical.
        # Compute once and reuse — bit-identical, half the attention work.
        out_all = window_attention_pallas(q, k, v, bias, mask_arr, scale, wb, period_blocks)
        aw_all = out_all.transpose(0, 2, 1, 3).reshape(Bw, N, C)
        aw = jnp.concatenate([aw_all, aw_all], axis=-1)          # (Bw,N,2C)
        aw = matmul_bias(aw.reshape(Bw * N, 2 * C),
                         p["cloud_conv"]["w"], p["cloud_conv"]["b"]).reshape(Bw, N, C)

        shifted_out = window_reverse(aw, ws, H, W)
        x_attn = jnp.roll(shifted_out, shift=(shift, shift), axis=(1, 2)) if shift > 0 else shifted_out

        conv_plus = dwconv5_reflect(V, p["conv"]["w"], p["conv"]["b"], add=x_attn)
        out = conv1x1(conv_plus, p["proj"]["w"], p["proj"]["b"], res=residual)
    else:  # DWConv-only path
        conv_out = dwconv5_reflect(V, p["conv"]["w"], p["conv"]["b"])
        out = conv1x1(conv_out, p["proj"]["w"], p["proj"]["b"], res=residual)
    return out                                                   # already includes residual


def mlp_forward(p, x, residual):
    h = conv1x1(x, p["fc1"]["w"], p["fc1"]["b"], relu=True)
    return conv1x1(h, p["fc2"]["w"], p["fc2"]["b"], res=residual)


def block_forward(p, cfg, x):
    identity = x
    xn = groupnorm(x, p["norm1"]["w"], p["norm1"]["b"], groups=4) if cfg["use_attn"] else x
    x = attention_forward(p["attn"], cfg, xn, residual=identity)  # = identity + attn(...)
    return mlp_forward(p["mlp"], x, residual=x)                   # = x + mlp(x)


def basic_layer_forward(params_list, cfg_list, x):
    for p, c in zip(params_list, cfg_list):
        x = block_forward(p, c, x)
    return x


def skfusion_forward(p, feats):
    B, H, W, C = feats[0].shape
    stacked = jnp.stack(feats, axis=1)                           # (B,2,H,W,C)
    fsum = jnp.sum(stacked, axis=1)
    pooled = jnp.mean(fsum, axis=(1, 2))                         # (B,C)
    h = matmul_bias(pooled, p["w1"], None, relu=True)
    a = matmul_bias(h, p["w2"], None).reshape(B, 2, C)
    a = jax.nn.softmax(a, axis=1)
    return jnp.sum(stacked * a[:, :, None, None, :], axis=1)


# ----------------------------------------------------------------------------
# Full model
# ----------------------------------------------------------------------------

def build_decloudformer(seed=0, in_chans=3, out_chans=4, window_size=4,
                        embed_dims=(24, 48, 96, 48, 24),
                        mlp_ratios=(2.0, 4.0, 4.0, 2.0, 2.0),
                        depths=(2, 2, 2, 1, 1),
                        num_heads=(2, 4, 6, 1, 1),
                        attn_ratio=(0.25, 0.5, 0.75, 0.0, 0.0),
                        input_size=16):
    kg = KeyGen(seed)
    params, cfgs = {}, {}
    params["patch_embed"] = conv_params(kg, 3, in_chans, embed_dims[0])
    resolutions = [input_size, input_size // 2, input_size // 4, input_size // 2, input_size]
    for li in range(5):
        lp, lc = build_basic_layer(kg, embed_dims[li], resolutions[li], depths[li],
                                   num_heads[li], mlp_ratios[li], window_size, attn_ratio[li])
        params[f"layer{li + 1}"] = lp
        cfgs[f"layer{li + 1}"] = lc
    params["patch_merge1"] = conv_params(kg, 2, embed_dims[0], embed_dims[1])
    params["skip1"] = lin_params(kg, embed_dims[0], embed_dims[0])
    params["patch_merge2"] = conv_params(kg, 2, embed_dims[1], embed_dims[2])
    params["skip2"] = lin_params(kg, embed_dims[1], embed_dims[1])
    params["patch_split1"] = lin_params(kg, embed_dims[2], embed_dims[3] * 4)
    params["fusion1"] = skfusion_params(kg, embed_dims[3])
    params["patch_split2"] = lin_params(kg, embed_dims[3], embed_dims[4] * 4)
    params["fusion2"] = skfusion_params(kg, embed_dims[4])
    params["patch_unembed"] = conv_params(kg, 3, embed_dims[4], out_chans)

    patch_size = 4

    def forward(prm, x_nchw):
        Hin, Win = x_nchw.shape[2], x_nchw.shape[3]
        ph = (patch_size - Hin % patch_size) % patch_size
        pw = (patch_size - Win % patch_size) % patch_size
        if ph or pw:
            x_nchw = jnp.pad(x_nchw, ((0, 0), (0, 0), (0, ph), (0, pw)), mode="reflect")
        xin = x_nchw
        f = jnp.transpose(x_nchw, (0, 2, 3, 1))                  # NHWC

        f = conv3x3_reflect(f, prm["patch_embed"]["w"], prm["patch_embed"]["b"])
        f = basic_layer_forward(prm["layer1"], cfgs["layer1"], f)
        skip1 = f
        f = conv2x2_s2(f, prm["patch_merge1"]["w"], prm["patch_merge1"]["b"])
        f = basic_layer_forward(prm["layer2"], cfgs["layer2"], f)
        skip2 = f
        f = conv2x2_s2(f, prm["patch_merge2"]["w"], prm["patch_merge2"]["b"])
        f = basic_layer_forward(prm["layer3"], cfgs["layer3"], f)
        f = pixel_shuffle(conv1x1(f, prm["patch_split1"]["w"], prm["patch_split1"]["b"]), 2)
        skip2p = conv1x1(skip2, prm["skip2"]["w"], prm["skip2"]["b"])
        f = skfusion_forward(prm["fusion1"], [f, skip2p]) + f
        f = basic_layer_forward(prm["layer4"], cfgs["layer4"], f)
        f = pixel_shuffle(conv1x1(f, prm["patch_split2"]["w"], prm["patch_split2"]["b"]), 2)
        skip1p = conv1x1(skip1, prm["skip1"]["w"], prm["skip1"]["b"])
        f = skfusion_forward(prm["fusion2"], [f, skip1p]) + f
        f = basic_layer_forward(prm["layer5"], cfgs["layer5"], f)
        feat = conv3x3_reflect(f, prm["patch_unembed"]["w"], prm["patch_unembed"]["b"])
        feat = jnp.transpose(feat, (0, 3, 1, 2))                 # (B,out_chans,H,W)

        K = feat[:, :1]
        Bb = feat[:, 1:1 + in_chans]
        out = K * xin - Bb + xin
        return out[:, :, :Hin, :Win]

    return params, cfgs, jax.jit(forward)


# ----------------------------------------------------------------------------
# Driver
# ----------------------------------------------------------------------------

if __name__ == "__main__":
    params, cfgs, forward = build_decloudformer(
        seed=0, in_chans=3, out_chans=4, window_size=4,
        embed_dims=(24, 48, 96, 48, 24),
        mlp_ratios=(2.0, 4.0, 4.0, 2.0, 2.0),
        depths=(2, 2, 2, 1, 1),
        num_heads=(2, 4, 6, 1, 1),
        attn_ratio=(0.25, 0.5, 0.75, 0.0, 0.0),
        input_size=16,
    )
    x = jax.random.normal(jax.random.PRNGKey(0), (2, 3, 16, 16), dtype=jnp.float32)
    y = forward(params, x)
    jax.block_until_ready(y)
    assert y.shape == (2, 3, 16, 16), y.shape
    assert bool(jnp.all(jnp.isfinite(y)))
    print("KERNEL_OK")
</pallas_src>

<mosaic_0001>
module attributes {stable_mosaic.version = 11 : i64} {
  func.func @_mm_kernel(%arg0: i32, %arg1: memref<256x2xbf16, #tpu.memory_space<vmem>>, %arg2: memref<2x256xbf16, #tpu.memory_space<vmem>>, %arg3: memref<1x256xf32, #tpu.memory_space<vmem>>, %arg4: memref<256x256xf32, #tpu.memory_space<vmem>>) attributes {dimension_semantics = [#tpu.dimension_semantics<parallel>], iteration_bounds = array<i64: 1>, scalar_prefetch = 0 : i64, scratch_operands = 0 : i64, tpu.core_type = #tpu.core_type<tc>, window_params = [{transform_indices = @transform_0, window_bounds = array<i64: 256, 2>}, {pipeline_mode = #tpu.pipeline_mode<synchronous>, transform_indices = @transform_1, window_bounds = array<i64: 2, 256>}, {pipeline_mode = #tpu.pipeline_mode<synchronous>, transform_indices = @transform_2, window_bounds = array<i64: 1, 256>}, {transform_indices = @transform_3, window_bounds = array<i64: 256, 256>}]} {
    %c0 = arith.constant 0 : index
    %c0_0 = arith.constant 0 : index
    %0 = vector.load %arg1[%c0, %c0_0] : memref<256x2xbf16, #tpu.memory_space<vmem>>, vector<256x2xbf16>
    %c0_1 = arith.constant 0 : index
    %c0_2 = arith.constant 0 : index
    %1 = vector.load %arg2[%c0_1, %c0_2] : memref<2x256xbf16, #tpu.memory_space<vmem>>, vector<2x256xbf16>
    %cst = arith.constant dense<0.000000e+00> : vector<256x256xf32>
    %2 = tpu.matmul %0, %1, %cst {dimension_numbers = #tpu.dot_dimension_numbers<[1], [0], [0], [1], [0, 0, 1, 1], [], []>} : vector<256x2xbf16>, vector<2x256xbf16>, vector<256x256xf32> -> vector<256x256xf32>
    %c0_3 = arith.constant 0 : index
    %c0_4 = arith.constant 0 : index
    %3 = vector.load %arg3[%c0_3, %c0_4] : memref<1x256xf32, #tpu.memory_space<vmem>>, vector<1x256xf32>
    %4 = vector.broadcast %3 : vector<1x256xf32> to vector<256x256xf32>
    %5 = arith.addf %2, %4 : vector<256x256xf32>
    %cst_5 = arith.constant 0.000000e+00 : f32
    %6 = vector.broadcast %cst_5 : f32 to vector<256x256xf32>
    %7 = arith.maximumf %5, %6 : vector<256x256xf32>
    %c0_6 = arith.constant 0 : index
    %c0_7 = arith.constant 0 : index
    %8 = vector.load %arg4[%c0_6, %c0_7] : memref<256x256xf32, #tpu.memory_space<vmem>>, vector<256x256xf32>
    tpu.vector_store %arg4[%c0_6, %c0_7], %7 {strides = array<i32>} : memref<256x256xf32, #tpu.memory_space<vmem>>, vector<256x256xf32>,
    return
  }
  func.func @transform_0(%arg0: i32) -> (i32, i32) {
    %c0_i32 = arith.constant 0 : i32
    %c0_i32_0 = arith.constant 0 : i32
    return %arg0, %c0_i32 : i32, i32
  }
  func.func @transform_1(%arg0: i32) -> (i32, i32) {
    %c0_i32 = arith.constant 0 : i32
    %c0_i32_0 = arith.constant 0 : i32
    %c0_i32_1 = arith.constant 0 : i32
    return %c0_i32, %c0_i32_0 : i32, i32
  }
  func.func @transform_2(%arg0: i32) -> (i32, i32) {
    %c0_i32 = arith.constant 0 : i32
    %c0_i32_0 = arith.constant 0 : i32
    %c0_i32_1 = arith.constant 0 : i32
    return %c0_i32, %c0_i32_0 : i32, i32
  }
  func.func @transform_3(%arg0: i32) -> (i32, i32) {
    %c0_i32 = arith.constant 0 : i32
    %c0_i32_0 = arith.constant 0 : i32
    return %arg0, %c0_i32 : i32, i32
  }
}

</mosaic_0001>

<llo_original>
// kernel: tpu_custom_call.1
$region0: #{tpu_custom_call.1}
  #allocation0 [shape = 'u32[]', space=smem, size = 0x4, offset = 0x4, fixed_abs, tag = 'smem constant byte address 0x4 - core index']
  #allocation1 [shape = 'u32[72,128]{1,0:T(1,128)}', space=vmem, size = 0x9000, scoped, tag = 'internal scratch']
  %s0 = inlined_call_operand.vmem [shape: bf16[256,2], index: 0, kind: input, shape index: {}]
  %s1 = inlined_call_operand.vmem [shape: bf16[2,256], index: 1, kind: input, shape index: {}]
  %s2 = inlined_call_operand.vmem [shape: f32[1,256], index: 2, kind: input, shape index: {}]
  %s3 = inlined_call_operand.hbm [shape: f32[256,256], index: 3, kind: output, shape index: {}]
  %s4 = sld [smem:[#allocation0]]
  $region22: #{tpu_custom_call.1} parent=0
    _
  %s6 = ssub.s32 1, %s4
  %s7 = scalar_select 0, %s6, %s4
  $region1: #{tpu_custom_call.1} parent=0
    #allocation2 [shape = 'u8[262144]{0}', space=vmem, size = 0x40000, scoped, tag = 'output window, operand 0, single buffered']
    #allocation3 [shape = 's32[1]{0}', space=sflag, size = 0x4, scoped, tag = 'scoped memory for tpu_custom_call.1']
    %8 = vsyncpa [#allocation3], 0
    // Predicated region
    $region2: #{tpu_custom_call.1} parent=1 // pred_check
      _
    $region3: #{tpu_custom_call.1} parent=1 // pred_check_branch
      %10 = sbr.rel (0) target = $region5
    $region4: #{tpu_custom_call.1} parent=1 // pred_region
      _
    $region5: #{tpu_custom_call.1} parent=1 // pred_fallthru
      _
    // Predicated region
    $region6: #{tpu_custom_call.1} parent=1 // pred_check
      _
    $region7: #{tpu_custom_call.1} parent=1 // pred_check_branch
      %12 = sbr.rel (0) target = $region9
    $region8: #{tpu_custom_call.1} parent=1 // pred_region
      _
    $region9: #{tpu_custom_call.1} parent=1 // pred_fallthru
      _
    // Predicated region
    $region10: #{tpu_custom_call.1} parent=1 // pred_check
      _
    $region11: #{tpu_custom_call.1} parent=1 // pred_check_branch
      %14 = sbr.rel (0) target = $region13
    $region12: #{tpu_custom_call.1} parent=1 // pred_region
      _
    $region13: #{tpu_custom_call.1} parent=1 // pred_fallthru
      _
    %v16 = vld [vmem:[%s0] sm:$0xf]
    %v17 = vld [vmem:[%s0 + $0x4] sm:$0xf]
    %v18 = vld [vmem:[%s0 + $0x8] sm:$0xf]
    %v19 = vld [vmem:[%s0 + $0xc] sm:$0xf]
    %v20 = vld [vmem:[%s0 + $0x10] sm:$0xf]
    %v21 = vld [vmem:[%s0 + $0x14] sm:$0xf]
    %v22 = vld [vmem:[%s0 + $0x18] sm:$0xf]
    %v23 = vld [vmem:[%s0 + $0x1c] sm:$0xf]
    %v24 = vld [vmem:[%s0 + $0x20] sm:$0xf]
    %v25 = vld [vmem:[%s0 + $0x24] sm:$0xf]
    %v26 = vld [vmem:[%s0 + $0x28] sm:$0xf]
    %v27 = vld [vmem:[%s0 + $0x2c] sm:$0xf]
    %v28 = vld [vmem:[%s0 + $0x30] sm:$0xf]
    %v29 = vld [vmem:[%s0 + $0x34] sm:$0xf]
    %v30 = vld [vmem:[%s0 + $0x38] sm:$0xf]
    %v31 = vld [vmem:[%s0 + $0x3c] sm:$0xf]
    %v32 = vld [vmem:[%s0 + $0x40] sm:$0xf]
    %v33 = vld [vmem:[%s0 + $0x44] sm:$0xf]
    %v34 = vld [vmem:[%s0 + $0x48] sm:$0xf]
    %v35 = vld [vmem:[%s0 + $0x4c] sm:$0xf]
    %v36 = vld [vmem:[%s0 + $0x50] sm:$0xf]
    %v37 = vld [vmem:[%s0 + $0x54] sm:$0xf]
    %v38 = vld [vmem:[%s0 + $0x58] sm:$0xf]
    %v39 = vld [vmem:[%s0 + $0x5c] sm:$0xf]
    %v40 = vld [vmem:[%s0 + $0x60] sm:$0xf]
    %v41 = vld [vmem:[%s0 + $0x64] sm:$0xf]
    %v42 = vld [vmem:[%s0 + $0x68] sm:$0xf]
    %v43 = vld [vmem:[%s0 + $0x6c] sm:$0xf]
    %v44 = vld [vmem:[%s0 + $0x70] sm:$0xf]
    %v45 = vld [vmem:[%s0 + $0x74] sm:$0xf]
    %v46 = vld [vmem:[%s0 + $0x78] sm:$0xf]
    %v47 = vld [vmem:[%s0 + $0x7c] sm:$0xf]
    %v48 = vld [vmem:[%s1] sm:$0x3]
    %v49 = vld [vmem:[%s2] sm:$0x3]
    %v51 = vperm.slane %v49, 0
    %v52 = vperm.slane %v49, 1
    %v87 = vunpack.c.l.b16 %v16
    %v88 = vunpack.c.l.b16 %v17
    %v89 = vunpack.c.l.b16 %v18
    %v90 = vunpack.c.l.b16 %v19
    %v91 = vunpack.c.l.b16 %v20
    %v92 = vunpack.c.l.b16 %v21
    %v93 = vunpack.c.l.b16 %v22
    %v94 = vunpack.c.l.b16 %v23
    %v95 = vunpack.c.l.b16 %v24
    %v96 = vunpack.c.l.b16 %v25
    %v97 = vunpack.c.l.b16 %v26
    %v98 = vunpack.c.l.b16 %v27
    %v99 = vunpack.c.l.b16 %v28
    %v100 = vunpack.c.l.b16 %v29
    %v101 = vunpack.c.l.b16 %v30
    %v102 = vunpack.c.l.b16 %v31
    %v103 = vunpack.c.l.b16 %v32
    %v104 = vunpack.c.l.b16 %v33
    %v105 = vunpack.c.l.b16 %v34
    %v106 = vunpack.c.l.b16 %v35
    %v107 = vunpack.c.l.b16 %v36
    %v108 = vunpack.c.l.b16 %v37
    %v109 = vunpack.c.l.b16 %v38
    %v110 = vunpack.c.l.b16 %v39
    %v111 = vunpack.c.l.b16 %v40
    %v112 = vunpack.c.l.b16 %v41
    %v113 = vunpack.c.l.b16 %v42
    %v114 = vunpack.c.l.b16 %v43
    %v115 = vunpack.c.l.b16 %v44
    %v116 = vunpack.c.l.b16 %v45
    %v117 = vunpack.c.l.b16 %v46
    %v118 = vunpack.c.l.b16 %v47
    %v119 = vpack.c.b16 %v88, %v87
    %v120 = vpack.c.b16 %v90, %v89
    %v121 = vpack.c.b16 %v92, %v91
    %v122 = vpack.c.b16 %v94, %v93
    %v123 = vpack.c.b16 %v96, %v95
    %v124 = vpack.c.b16 %v98, %v97
    %v125 = vpack.c.b16 %v100, %v99
    %v126 = vpack.c.b16 %v102, %v101
    %v127 = vpack.c.b16 %v104, %v103
    %v128 = vpack.c.b16 %v106, %v105
    %v129 = vpack.c.b16 %v108, %v107
    %v130 = vpack.c.b16 %v110, %v109
    %v131 = vpack.c.b16 %v112, %v111
    %v132 = vpack.c.b16 %v114, %v113
    %v133 = vpack.c.b16 %v116, %v115
    %v134 = vpack.c.b16 %v118, %v117
    %136 = vst [vmem:[#allocation1] ss:$9 sm:$0xff] %v48
    %v137 = vld [vmem:[#allocation1] sm:$0xff]
    %v138 = vld [vmem:[#allocation1 + $0x9] sm:$0xff]
    %vm139 = vcmask 15360
    %v141 = vsel %vm139, %v119, 0
    %v144 = vsel %vm139, %v120, 0
    %v147 = vsel %vm139, %v121, 0
    %v150 = vsel %vm139, %v122, 0
    %v153 = vsel %vm139, %v123, 0
    %v156 = vsel %vm139, %v124, 0
    %v159 = vsel %vm139, %v125, 0
    %v162 = vsel %vm139, %v126, 0
    %v165 = vsel %vm139, %v127, 0
    %v168 = vsel %vm139, %v128, 0
    %v171 = vsel %vm139, %v129, 0
    %v174 = vsel %vm139, %v130, 0
    %v177 = vsel %vm139, %v131, 0
    %v180 = vsel %vm139, %v132, 0
    %v183 = vsel %vm139, %v133, 0
    %v186 = vsel %vm139, %v134, 0
    %vm188 = vcmask 1040384
    %v189 = vsel %vm188, %v137, 0
    %v191 = vsel %vm188, %v138, 0
    %193 = vmatpush.bf16.msra.mxu0 0
    %194 = vmatpush.bf16.msra.mxu0 0
    %195 = vmatpush.bf16.msra.mxu0 0
    %196 = vmatpush.bf16.msra.mxu0 0
    %197 = vmatpush.bf16.msra.mxu0 0
    %198 = vmatpush.bf16.msra.mxu0 0
    %199 = vmatpush.bf16.msra.mxu0 0
    %200 = vmatpush.bf16.msra.mxu0 %v189
    %201 = vmatmul.bf16.gmra.mxu0 %v141
    %v202 = vpop.f32.mrf.mxu0
    %v203 = vadd.f32 %v51, %v202
    %v204 = vpop.f32.mrf.mxu0
    %v205 = vadd.f32 %v51, %v204
    %206 = vmatmul.bf16.gmra.mxu0 %v144
    %v207 = vpop.f32.mrf.mxu0
    %v208 = vadd.f32 %v51, %v207
    %v209 = vpop.f32.mrf.mxu0
    %v210 = vadd.f32 %v51, %v209
    %211 = vmatmul.bf16.gmra.mxu0 %v147
    %v212 = vpop.f32.mrf.mxu0
    %v213 = vadd.f32 %v51, %v212
    %v214 = vpop.f32.mrf.mxu0
    %v215 = vadd.f32 %v51, %v214
    %216 = vmatmul.bf16.gmra.mxu0 %v150
    %v217 = vpop.f32.mrf.mxu0
    %v218 = vadd.f32 %v51, %v217
    %v219 = vpop.f32.mrf.mxu0
    %v220 = vadd.f32 %v51, %v219
    %221 = vmatmul.bf16.gmra.mxu0 %v153
    %v222 = vpop.f32.mrf.mxu0
    %v223 = vadd.f32 %v51, %v222
    %v224 = vpop.f32.mrf.mxu0
    %v225 = vadd.f32 %v51, %v224
    %226 = vmatmul.bf16.gmra.mxu0 %v156
    %v227 = vpop.f32.mrf.mxu0
    %v228 = vadd.f32 %v51, %v227
    %v229 = vpop.f32.mrf.mxu0
    %v230 = vadd.f32 %v51, %v229
    %231 = vmatmul.bf16.gmra.mxu0 %v159
    %v232 = vpop.f32.mrf.mxu0
    %v233 = vadd.f32 %v51, %v232
    %v234 = vpop.f32.mrf.mxu0
    %v235 = vadd.f32 %v51, %v234
    %236 = vmatmul.bf16.gmra.mxu0 %v162
    %v237 = vpop.f32.mrf.mxu0
    %v238 = vadd.f32 %v51, %v237
    %v239 = vpop.f32.mrf.mxu0
    %v240 = vadd.f32 %v51, %v239
    %241 = vmatmul.bf16.gmra.mxu0 %v165
    %v242 = vpop.f32.mrf.mxu0
    %v243 = vadd.f32 %v51, %v242
    %v244 = vpop.f32.mrf.mxu0
    %v245 = vadd.f32 %v51, %v244
    %246 = vmatmul.bf16.gmra.mxu0 %v168
    %v247 = vpop.f32.mrf.mxu0
    %v248 = vadd.f32 %v51, %v247
    %v249 = vpop.f32.mrf.mxu0
    %v250 = vadd.f32 %v51, %v249
    %251 = vmatmul.bf16.gmra.mxu0 %v171
    %v252 = vpop.f32.mrf.mxu0
    %v253 = vadd.f32 %v51, %v252
    %v254 = vpop.f32.mrf.mxu0
    %v255 = vadd.f32 %v51, %v254
    %256 = vmatmul.bf16.gmra.mxu0 %v174
    %v257 = vpop.f32.mrf.mxu0
    %v258 = vadd.f32 %v51, %v257
    %v259 = vpop.f32.mrf.mxu0
    %v260 = vadd.f32 %v51, %v259
    %261 = vmatmul.bf16.gmra.mxu0 %v177
    %v262 = vpop.f32.mrf.mxu0
    %v263 = vadd.f32 %v51, %v262
    %v264 = vpop.f32.mrf.mxu0
    %v265 = vadd.f32 %v51, %v264
    %266 = vmatmul.bf16.gmra.mxu0 %v180
    %v267 = vpop.f32.mrf.mxu0
    %v268 = vadd.f32 %v51, %v267
    %v269 = vpop.f32.mrf.mxu0
    %v270 = vadd.f32 %v51, %v269
    %271 = vmatmul.bf16.gmra.mxu0 %v183
    %v272 = vpop.f32.mrf.mxu0
    %v273 = vadd.f32 %v51, %v272
    %v274 = vpop.f32.mrf.mxu0
    %v275 = vadd.f32 %v51, %v274
    %276 = vmatmul.bf16.gmra.mxu0 %v186
    %v277 = vpop.f32.mrf.mxu0
    %v278 = vadd.f32 %v51, %v277
    %v279 = vpop.f32.mrf.mxu0
    %v280 = vadd.f32 %v51, %v279
    %281 = vdwg.mxu0
    %282 = vmatpush.bf16.msra.mxu0 0
    %283 = vmatpush.bf16.msra.mxu0 0
    %284 = vmatpush.bf16.msra.mxu0 0
    %285 = vmatpush.bf16.msra.mxu0 0
    %286 = vmatpush.bf16.msra.mxu0 0
    %287 = vmatpush.bf16.msra.mxu0 0
    %288 = vmatpush.bf16.msra.mxu0 0
    %289 = vmatpush.bf16.msra.mxu0 %v191
    %290 = vmatmul.bf16.gmra.mxu0 %v141
    %v291 = vpop.f32.mrf.mxu0
    %v292 = vadd.f32 %v52, %v291
    %v293 = vpop.f32.mrf.mxu0
    %v294 = vadd.f32 %v52, %v293
    %295 = vmatmul.bf16.gmra.mxu0 %v144
    %v296 = vpop.f32.mrf.mxu0
    %v297 = vadd.f32 %v52, %v296
    %v298 = vpop.f32.mrf.mxu0
    %v299 = vadd.f32 %v52, %v298
    %300 = vmatmul.bf16.gmra.mxu0 %v147
    %v301 = vpop.f32.mrf.mxu0
    %v302 = vadd.f32 %v52, %v301
    %v303 = vpop.f32.mrf.mxu0
    %v304 = vadd.f32 %v52, %v303
    %305 = vmatmul.bf16.gmra.mxu0 %v150
    %v306 = vpop.f32.mrf.mxu0
    %v307 = vadd.f32 %v52, %v306
    %v308 = vpop.f32.mrf.mxu0
    %v309 = vadd.f32 %v52, %v308
    %310 = vmatmul.bf16.gmra.mxu0 %v153
    %v311 = vpop.f32.mrf.mxu0
    %v312 = vadd.f32 %v52, %v311
    %v313 = vpop.f32.mrf.mxu0
    %v314 = vadd.f32 %v52, %v313
    %315 = vmatmul.bf16.gmra.mxu0 %v156
    %v316 = vpop.f32.mrf.mxu0
    %v317 = vadd.f32 %v52, %v316
    %v318 = vpop.f32.mrf.mxu0
    %v319 = vadd.f32 %v52, %v318
    %320 = vmatmul.bf16.gmra.mxu0 %v159
    %v321 = vpop.f32.mrf.mxu0
    %v322 = vadd.f32 %v52, %v321
    %v323 = vpop.f32.mrf.mxu0
    %v324 = vadd.f32 %v52, %v323
    %325 = vmatmul.bf16.gmra.mxu0 %v162
    %v326 = vpop.f32.mrf.mxu0
    %v327 = vadd.f32 %v52, %v326
    %v328 = vpop.f32.mrf.mxu0
    %v329 = vadd.f32 %v52, %v328
    %330 = vmatmul.bf16.gmra.mxu0 %v165
    %v331 = vpop.f32.mrf.mxu0
    %v332 = vadd.f32 %v52, %v331
    %v333 = vpop.f32.mrf.mxu0
    %v334 = vadd.f32 %v52, %v333
    %335 = vmatmul.bf16.gmra.mxu0 %v168
    %v336 = vpop.f32.mrf.mxu0
    %v337 = vadd.f32 %v52, %v336
    %v338 = vpop.f32.mrf.mxu0
    %v339 = vadd.f32 %v52, %v338
    %340 = vmatmul.bf16.gmra.mxu0 %v171
    %v341 = vpop.f32.mrf.mxu0
    %v342 = vadd.f32 %v52, %v341
    %v343 = vpop.f32.mrf.mxu0
    %v344 = vadd.f32 %v52, %v343
    %345 = vmatmul.bf16.gmra.mxu0 %v174
    %v346 = vpop.f32.mrf.mxu0
    %v347 = vadd.f32 %v52, %v346
    %v348 = vpop.f32.mrf.mxu0
    %v349 = vadd.f32 %v52, %v348
    %350 = vmatmul.bf16.gmra.mxu0 %v177
    %v351 = vpop.f32.mrf.mxu0
    %v352 = vadd.f32 %v52, %v351
    %v353 = vpop.f32.mrf.mxu0
    %v354 = vadd.f32 %v52, %v353
    %355 = vmatmul.bf16.gmra.mxu0 %v180
    %v356 = vpop.f32.mrf.mxu0
    %v357 = vadd.f32 %v52, %v356
    %v358 = vpop.f32.mrf.mxu0
    %v359 = vadd.f32 %v52, %v358
    %360 = vmatmul.bf16.gmra.mxu0 %v183
    %v361 = vpop.f32.mrf.mxu0
    %v362 = vadd.f32 %v52, %v361
    %v363 = vpop.f32.mrf.mxu0
    %v364 = vadd.f32 %v52, %v363
    %365 = vmatmul.bf16.gmra.mxu0 %v186
    %v366 = vpop.f32.mrf.mxu0
    %v367 = vadd.f32 %v52, %v366
    %v368 = vpop.f32.mrf.mxu0
    %v369 = vadd.f32 %v52, %v368
    %370 = vdwg.mxu0
    %v371 = vmax.f32 %v203, 0.0
    %v372 = vmax.f32 %v292, 0.0
    %v373 = vmax.f32 %v205, 0.0
    %v374 = vmax.f32 %v294, 0.0
    %v375 = vmax.f32 %v208, 0.0
    %v376 = vmax.f32 %v297, 0.0
    %v377 = vmax.f32 %v210, 0.0
    %v378 = vmax.f32 %v299, 0.0
    %v379 = vmax.f32 %v213, 0.0
    %v380 = vmax.f32 %v302, 0.0
    %v381 = vmax.f32 %v215, 0.0
    %v382 = vmax.f32 %v304, 0.0
    %v383 = vmax.f32 %v218, 0.0
    %v384 = vmax.f32 %v307, 0.0
    %v385 = vmax.f32 %v220, 0.0
    %v386 = vmax.f32 %v309, 0.0
    %v387 = vmax.f32 %v223, 0.0
    %v388 = vmax.f32 %v312, 0.0
    %v389 = vmax.f32 %v225, 0.0
    %v390 = vmax.f32 %v314, 0.0
    %v391 = vmax.f32 %v228, 0.0
    %v392 = vmax.f32 %v317, 0.0
    %v393 = vmax.f32 %v230, 0.0
    %v394 = vmax.f32 %v319, 0.0
    %v395 = vmax.f32 %v233, 0.0
    %v396 = vmax.f32 %v322, 0.0
    %v397 = vmax.f32 %v235, 0.0
    %v398 = vmax.f32 %v324, 0.0
    %v399 = vmax.f32 %v238, 0.0
    %v400 = vmax.f32 %v327, 0.0
    %v401 = vmax.f32 %v240, 0.0
    %v402 = vmax.f32 %v329, 0.0
    %v403 = vmax.f32 %v243, 0.0
    %v404 = vmax.f32 %v332, 0.0
    %v405 = vmax.f32 %v245, 0.0
    %v406 = vmax.f32 %v334, 0.0
    %v407 = vmax.f32 %v248, 0.0
    %v408 = vmax.f32 %v337, 0.0
    %v409 = vmax.f32 %v250, 0.0
    %v410 = vmax.f32 %v339, 0.0
    %v411 = vmax.f32 %v253, 0.0
    %v412 = vmax.f32 %v342, 0.0
    %v413 = vmax.f32 %v255, 0.0
    %v414 = vmax.f32 %v344, 0.0
    %v415 = vmax.f32 %v258, 0.0
    %v416 = vmax.f32 %v347, 0.0
    %v417 = vmax.f32 %v260, 0.0
    %v418 = vmax.f32 %v349, 0.0
    %v419 = vmax.f32 %v263, 0.0
    %v420 = vmax.f32 %v352, 0.0
    %v421 = vmax.f32 %v265, 0.0
    %v422 = vmax.f32 %v354, 0.0
    %v423 = vmax.f32 %v268, 0.0
    %v424 = vmax.f32 %v357, 0.0
    %v425 = vmax.f32 %v270, 0.0
    %v426 = vmax.f32 %v359, 0.0
    %v427 = vmax.f32 %v273, 0.0
    %v428 = vmax.f32 %v362, 0.0
    %v429 = vmax.f32 %v275, 0.0
    %v430 = vmax.f32 %v364, 0.0
    %v431 = vmax.f32 %v278, 0.0
    %v432 = vmax.f32 %v367, 0.0
    %v433 = vmax.f32 %v280, 0.0
    %v434 = vmax.f32 %v369, 0.0
    %435 = vst [vmem:[#allocation2] sm:$0xff] %v371
    %436 = vst [vmem:[#allocation2 + $0x8] sm:$0xff] %v372
    %437 = vst [vmem:[#allocation2 + $0x10] sm:$0xff] %v373
    %438 = vst [vmem:[#allocation2 + $0x18] sm:$0xff] %v374
    %439 = vst [vmem:[#allocation2 + $0x20] sm:$0xff] %v375
    %440 = vst [vmem:[#allocation2 + $0x28] sm:$0xff] %v376
    %441 = vst [vmem:[#allocation2 + $0x30] sm:$0xff] %v377
    %442 = vst [vmem:[#allocation2 + $0x38] sm:$0xff] %v378
    %443 = vst [vmem:[#allocation2 + $0x40] sm:$0xff] %v379
    %444 = vst [vmem:[#allocation2 + $0x48] sm:$0xff] %v380
    %445 = vst [vmem:[#allocation2 + $0x50] sm:$0xff] %v381
    %446 = vst [vmem:[#allocation2 + $0x58] sm:$0xff] %v382
    %447 = vst [vmem:[#allocation2 + $0x60] sm:$0xff] %v383
    %448 = vst [vmem:[#allocation2 + $0x68] sm:$0xff] %v384
    %449 = vst [vmem:[#allocation2 + $0x70] sm:$0xff] %v385
    %450 = vst [vmem:[#allocation2 + $0x78] sm:$0xff] %v386
    %451 = vst [vmem:[#allocation2 + $0x80] sm:$0xff] %v387
    %452 = vst [vmem:[#allocation2 + $0x88] sm:$0xff] %v388
    %453 = vst [vmem:[#allocation2 + $0x90] sm:$0xff] %v389
    %454 = vst [vmem:[#allocation2 + $0x98] sm:$0xff] %v390
    %455 = vst [vmem:[#allocation2 + $0xa0] sm:$0xff] %v391
    %456 = vst [vmem:[#allocation2 + $0xa8] sm:$0xff] %v392
    %457 = vst [vmem:[#allocation2 + $0xb0] sm:$0xff] %v393
    %458 = vst [vmem:[#allocation2 + $0xb8] sm:$0xff] %v394
    %459 = vst [vmem:[#allocation2 + $0xc0] sm:$0xff] %v395
    %460 = vst [vmem:[#allocation2 + $0xc8] sm:$0xff] %v396
    %461 = vst [vmem:[#allocation2 + $0xd0] sm:$0xff] %v397
    %462 = vst [vmem:[#allocation2 + $0xd8] sm:$0xff] %v398
    %463 = vst [vmem:[#allocation2 + $0xe0] sm:$0xff] %v399
    %464 = vst [vmem:[#allocation2 + $0xe8] sm:$0xff] %v400
    %465 = vst [vmem:[#allocation2 + $0xf0] sm:$0xff] %v401
    %466 = vst [vmem:[#allocation2 + $0xf8] sm:$0xff] %v402
    %467 = vst [vmem:[#allocation2 + $0x100] sm:$0xff] %v403
    %468 = vst [vmem:[#allocation2 + $0x108] sm:$0xff] %v404
    %469 = vst [vmem:[#allocation2 + $0x110] sm:$0xff] %v405
    %470 = vst [vmem:[#allocation2 + $0x118] sm:$0xff] %v406
    %471 = vst [vmem:[#allocation2 + $0x120] sm:$0xff] %v407
    %472 = vst [vmem:[#allocation2 + $0x128] sm:$0xff] %v408
    %473 = vst [vmem:[#allocation2 + $0x130] sm:$0xff] %v409
    %474 = vst [vmem:[#allocation2 + $0x138] sm:$0xff] %v410
    %475 = vst [vmem:[#allocation2 + $0x140] sm:$0xff] %v411
    %476 = vst [vmem:[#allocation2 + $0x148] sm:$0xff] %v412
    %477 = vst [vmem:[#allocation2 + $0x150] sm:$0xff] %v413
    %478 = vst [vmem:[#allocation2 + $0x158] sm:$0xff] %v414
    %479 = vst [vmem:[#allocation2 + $0x160] sm:$0xff] %v415
    %480 = vst [vmem:[#allocation2 + $0x168] sm:$0xff] %v416
    %481 = vst [vmem:[#allocation2 + $0x170] sm:$0xff] %v417
    %482 = vst [vmem:[#allocation2 + $0x178] sm:$0xff] %v418
    %483 = vst [vmem:[#allocation2 + $0x180] sm:$0xff] %v419
    %484 = vst [vmem:[#allocation2 + $0x188] sm:$0xff] %v420
    %485 = vst [vmem:[#allocation2 + $0x190] sm:$0xff] %v421
    %486 = vst [vmem:[#allocation2 + $0x198] sm:$0xff] %v422
    %487 = vst [vmem:[#allocation2 + $0x1a0] sm:$0xff] %v423
    %488 = vst [vmem:[#allocation2 + $0x1a8] sm:$0xff] %v424
    %489 = vst [vmem:[#allocation2 + $0x1b0] sm:$0xff] %v425
    %490 = vst [vmem:[#allocation2 + $0x1b8] sm:$0xff] %v426
    %491 = vst [vmem:[#allocation2 + $0x1c0] sm:$0xff] %v427
    %492 = vst [vmem:[#allocation2 + $0x1c8] sm:$0xff] %v428
    %493 = vst [vmem:[#allocation2 + $0x1d0] sm:$0xff] %v429
    %494 = vst [vmem:[#allocation2 + $0x1d8] sm:$0xff] %v430
    %495 = vst [vmem:[#allocation2 + $0x1e0] sm:$0xff] %v431
    %496 = vst [vmem:[#allocation2 + $0x1e8] sm:$0xff] %v432
    %497 = vst [vmem:[#allocation2 + $0x1f0] sm:$0xff] %v433
    %498 = vst [vmem:[#allocation2 + $0x1f8] sm:$0xff] %v434
    // Predicated region
    $region14: #{tpu_custom_call.1} parent=1 // pred_check
      _
    $region15: #{tpu_custom_call.1} parent=1 // pred_check_branch
      %500 = sbr.rel (0) target = $region17
    $region16: #{tpu_custom_call.1} parent=1 // pred_region
      %502 = vsyncadd [#allocation3], 0
      %s503 = sshll.u32 [#allocation2], 4
      %s504 = int_to_ptr.vmem [resolvable:$true] %s503
      %s505 = sshll.u32 %s3, 4
      %s506 = int_to_ptr.hbm [resolvable:$true] %s505
      %511 = dma.vmem_to_hbm [thread:$0]  %s504, 8192, %s506, [#allocation3], 256, 256, 16
    $region17: #{tpu_custom_call.1} parent=1 // pred_fallthru
      _
    // Predicated region
    $region18: #{tpu_custom_call.1} parent=1 // pred_check
      _
    $region19: #{tpu_custom_call.1} parent=1 // pred_check_branch
      %513 = sbr.rel (0) target = $region21
    $region20: #{tpu_custom_call.1} parent=1 // pred_region
      %515 = dma.done [#allocation3], 8192
    $region21: #{tpu_custom_call.1} parent=1 // pred_fallthru
      _
    %516 = vsyncpa [#allocation3], 1

</llo_original>
